<compile_context>
chip_gen: v7x
topology: tpu7x:2x2x1
jax: 0.10.0
libtpu: 0.0.40
codegen_flags: <defaults>
</compile_context>

<pallas_src>
import functools

import numpy as np
import jax
import jax.numpy as jnp
from jax.experimental import pallas as pl
from jax.experimental.pallas import tpu as pltpu


# ----------------------------------------------------------------------------
# Parameter construction (mirrors the PyTorch __init__)
# ----------------------------------------------------------------------------
def sinusoid_position_table(n_position, emb_dim):
    # identical to PositionalEncoder.position_encoding_init
    tbl = np.array(
        [[pos / np.power(10000, 2 * (j // 2) / emb_dim) for j in range(emb_dim)]
         if pos != 0 else np.zeros(emb_dim)
         for pos in range(n_position)]
    )
    tbl[1:, 0::2] = np.sin(tbl[1:, 0::2])
    tbl[1:, 1::2] = np.cos(tbl[1:, 1::2])
    return jnp.asarray(tbl, dtype=jnp.float32)


def _round_up(x, m):
    return (x + m - 1) // m * m


# ----------------------------------------------------------------------------
# Pallas kernel: TB batch elements per grid step, hops unrolled in-kernel
# ----------------------------------------------------------------------------
def _encoder_memnn_kernel(story_ref, pos_ref, emb_ref, out_ref, *, hops, emb_dim):
    TB, M, W = story_ref.shape          # batch tile, memory slots, tokens per slot
    Vp, NSp = emb_ref.shape             # padded vocab, padded (hops+1)*E
    E = emb_dim
    E_out = out_ref.shape[-1]
    R = TB * M

    emb = emb_ref[...]                  # (Vp, NSp) resident table (bf16)

    # ---- bag-of-words counts: counts[r, v] = #{w : story[r, w] == v} --------
    s = story_ref[...].reshape(R, W)                                     # (R, W)
    iota_v = jax.lax.broadcasted_iota(jnp.int32, (R, Vp), 1)
    counts = jnp.zeros((R, Vp), jnp.float32)
    for w in range(W):                  # W static & tiny; stays on the VPU
        counts = counts + (s[:, w:w + 1] == iota_v).astype(jnp.float32)
    counts = counts.astype(emb.dtype)   # bf16 exact: counts are small ints <= W
    # TODO(synk): for realistic vocab sizes (V ~ tens of thousands) replace the one-hot
    # counts matmul with an HBM-resident table (memory_space=pl.ANY) streamed over V tiles
    # via pltpu.emit_pipeline (or do the embedding-bag gather outside the kernel).

    # ---- fused projection: ONE MXU matmul yields m_A / m_C for ALL hops -----
    m_all = jnp.dot(counts, emb, preferred_element_type=jnp.float32)     # (R, NSp) f32
    m_all = m_all.reshape(TB, M, NSp)

    embed_pos = pos_ref[...]                                             # (TB, M, E)

    u = jnp.zeros((TB, 1, E), jnp.float32)          # self.get_state(bsz)
    for hop in range(hops):                         # hops is small & static
        m_A = m_all[:, :, hop * E:(hop + 1) * E]                         # (TB, M, E)
        if hop == 0:
            m_A = m_A + embed_pos                   # zeros if position=False
        # attention scores over the memory axis (flash-style batched matmuls)
        scores = jnp.einsum('bqe,bme->bqm', u, m_A,
                            preferred_element_type=jnp.float32)          # (TB, 1, M)
        mmax = jnp.max(scores, axis=-1, keepdims=True)
        p = jnp.exp(scores - mmax)
        denom = jnp.sum(p, axis=-1, keepdims=True)
        prob = p * pl.reciprocal(denom, approx=True)                     # (TB, 1, M)
        m_C = m_all[:, :, (hop + 1) * E:(hop + 2) * E]                   # (TB, M, E)
        o_k = jnp.einsum('bqm,bme->bqe', prob, m_C,
                         preferred_element_type=jnp.float32)             # (TB, 1, E)
        u = u + o_k

    out = u[:, 0, :]                                                     # (TB, E)
    if E_out > E:                                   # lane-dense (unmasked) store
        out = jnp.concatenate(
            [out, jnp.zeros((TB, E_out - E), jnp.float32)], axis=-1)
    out_ref[...] = out


# ----------------------------------------------------------------------------
# Wrapper: padding / stacking / positional hoist + pallas_call
# ----------------------------------------------------------------------------
def encoder_memnn_forward(story, embeddings, pos_table, *, hops, pad_id, position,
                          batch_tile=64, compute_dtype=jnp.bfloat16):
    B, M, W = story.shape
    n_emb, V, E = embeddings.shape
    assert n_emb == hops + 1

    # ---- hoisted positional encoding (depends only on story; cheap XLA gather) ----
    if position:
        notpad = story[:, :, 0] != pad_id
        positions = jnp.where(notpad, jnp.cumsum(notpad.astype(jnp.int32), axis=1), 0)
        embed_pos = pos_table[positions].astype(jnp.float32)            # (B, M, E)
    else:
        embed_pos = jnp.zeros((B, M, E), jnp.float32)

    # ---- stack & pad embedding tables: (hops+1, V, E) -> (Vp, NSp) bf16 ----
    NS = (hops + 1) * E
    Vp, NSp = _round_up(V, 128), _round_up(NS, 128)
    emb_stacked = jnp.transpose(embeddings, (1, 0, 2)).reshape(V, NS)
    emb_stacked = jnp.pad(emb_stacked, ((0, Vp - V), (0, NSp - NS)))
    emb_stacked = emb_stacked.astype(compute_dtype)

    # ---- batch blocking (grid over batch tiles; "parallel" for megacore) ----
    if B <= batch_tile:
        TB, B_pad = B, B                     # single grid step: block dim == full dim
    else:
        TB = _round_up(min(batch_tile, B), 8)    # output 2nd-minor block dim must be %8
        B_pad = _round_up(B, TB)
    if B_pad != B:
        story = jnp.pad(story, ((0, B_pad - B), (0, 0), (0, 0)), constant_values=pad_id)
        embed_pos = jnp.pad(embed_pos, ((0, B_pad - B), (0, 0), (0, 0)))

    E_out = _round_up(E, 128)                # lane-dense output block

    # explicit VMEM budget: v5e's default scoped VMEM is only 16 MiB, v7x physical is 64 MiB
    dsz = jnp.dtype(compute_dtype).itemsize
    need = (2 * (TB * M * W * 4 + TB * M * E * 4 + TB * E_out * 4)   # double-buffered tiles
            + 2 * Vp * NSp * dsz                                     # resident stacked table
            + 4 * TB * M * (Vp + NSp) * 4                            # in-kernel temporaries
            + (8 << 20))
    vmem_limit = int(min(max(need, 32 << 20), 48 << 20))

    kernel = functools.partial(_encoder_memnn_kernel, hops=hops, emb_dim=E)

    out = pl.pallas_call(
        kernel,
        out_shape=jax.ShapeDtypeStruct((B_pad, E_out), jnp.float32),
        grid=(B_pad // TB,),
        in_specs=[
            pl.BlockSpec((TB, M, W), lambda b: (b, 0, 0)),    # story batch tile
            pl.BlockSpec((TB, M, E), lambda b: (b, 0, 0)),    # positional tile
            pl.BlockSpec((Vp, NSp), lambda b: (0, 0)),        # stacked tables, resident
        ],
        out_specs=pl.BlockSpec((TB, E_out), lambda b: (b, 0)),
        compiler_params=pltpu.CompilerParams(
            dimension_semantics=("parallel",),
            vmem_limit_bytes=vmem_limit,
        ),
    )(story, embed_pos, emb_stacked)

    return out[:B, :E]                       # drop batch + lane padding


# ----------------------------------------------------------------------------
# Pure-JAX reference (direct transcription of the PyTorch forward, eval mode)
# ----------------------------------------------------------------------------
def encoder_memnn_ref(story, embeddings, pos_table, *, hops, pad_id, position):
    B, M, W = story.shape
    E = embeddings.shape[-1]
    notpad = story[:, :, 0] != pad_id
    positions = jnp.where(notpad, jnp.cumsum(notpad.astype(jnp.int32), axis=1), 0)
    embed_pos = pos_table[positions]                                 # (B, M, E)
    u = jnp.zeros((B, E), jnp.float32)
    for hop in range(hops):
        m_A = embeddings[hop][story].sum(axis=2)                     # (B, M, E)
        if position and hop == 0:
            m_A = m_A + embed_pos
        scores = jnp.sum(m_A * u[:, None, :], axis=2)                # (B, M)
        prob = jax.nn.softmax(scores, axis=1)
        m_C = embeddings[hop + 1][story].sum(axis=2)                 # (B, M, E)
        o_k = jnp.sum(m_C * prob[:, :, None], axis=1)                # (B, E)
        u = u + o_k
    return u


if __name__ == "__main__":
    # Small, module-consistent shapes
    B, M, W = 2, 8, 4          # batch, memory slots, tokens per memory slot
    V, E = 64, 32              # vocab size, embedding_dim
    HOPS = 3                   # hop
    MAX_S = M                  # max_s
    PAD_ID = 0                 # vocab.pad_id
    POSITION = True

    key = jax.random.PRNGKey(0)
    k_emb, k_story = jax.random.split(key)

    # C_0 .. C_HOPS weights ~ N(0, 0.1)  (.normal_(0, 0.1) overwrites the pad row too,
    # exactly as in the PyTorch module, so no row is zeroed here)
    embeddings = 0.1 * jax.random.normal(k_emb, (HOPS + 1, V, E), dtype=jnp.float32)
    pos_table = sinusoid_position_table(MAX_S + 1, E)                # (max_s+1, E)

    # story token ids in [1, V); pad out the tail of batch element 1
    story = jax.random.randint(k_story, (B, M, W), 1, V, dtype=jnp.int32)
    story = story.at[1, 6:, :].set(PAD_ID)

    # TODO(synk): training-mode dropout uses host-side numpy RNG (np.random.binomial);
    # only the eval-mode forward is implemented here.

    u_kernel = encoder_memnn_forward(
        story, embeddings, pos_table, hops=HOPS, pad_id=PAD_ID, position=POSITION)
    u_kernel = jax.block_until_ready(u_kernel)

    u_ref = encoder_memnn_ref(
        story, embeddings, pos_table, hops=HOPS, pad_id=PAD_ID, position=POSITION)

    # bf16 matmul operands + approx reciprocal in the kernel -> relaxed tolerance vs f32 ref
    np.testing.assert_allclose(np.asarray(u_kernel), np.asarray(u_ref),
                               rtol=1e-2, atol=1e-2)
    print("KERNEL_OK")
</pallas_src>

<mosaic_0001>
module attributes {stable_mosaic.version = 11 : i64} {
  func.func @_encoder_memnn_kernel(%arg0: i32, %arg1: memref<2x8x4xi32, #tpu.memory_space<vmem>>, %arg2: memref<2x8x32xf32, #tpu.memory_space<vmem>>, %arg3: memref<128x128xbf16, #tpu.memory_space<vmem>>, %arg4: memref<2x128xf32, #tpu.memory_space<vmem>>) attributes {dimension_semantics = [#tpu.dimension_semantics<parallel>], iteration_bounds = array<i64: 1>, scalar_prefetch = 0 : i64, scratch_operands = 0 : i64, tpu.core_type = #tpu.core_type<tc>, window_params = [{transform_indices = @transform_0, window_bounds = array<i64: 2, 8, 4>}, {transform_indices = @transform_1, window_bounds = array<i64: 2, 8, 32>}, {pipeline_mode = #tpu.pipeline_mode<synchronous>, transform_indices = @transform_2, window_bounds = array<i64: 128, 128>}, {transform_indices = @transform_3, window_bounds = array<i64: 2, 128>}]} {
    %c0 = arith.constant 0 : index
    %c0_0 = arith.constant 0 : index
    %0 = vector.load %arg3[%c0, %c0_0] : memref<128x128xbf16, #tpu.memory_space<vmem>>, vector<128x128xbf16>
    %c0_1 = arith.constant 0 : index
    %c0_2 = arith.constant 0 : index
    %c0_3 = arith.constant 0 : index
    %1 = vector.load %arg1[%c0_1, %c0_2, %c0_3] : memref<2x8x4xi32, #tpu.memory_space<vmem>>, vector<2x8x4xi32>
    %2 = vector.shape_cast %1 : vector<2x8x4xi32> to vector<16x4xi32>
    %3 = tpu.iota {dimensions = array<i32: 1>} : vector<16x128xi32>
    %cst = arith.constant 0.000000e+00 : f32
    %4 = vector.broadcast %cst : f32 to vector<16x128xf32>
    %5 = vector.extract_strided_slice %2 {offsets = [0, 0], sizes = [16, 1], strides = [1, 1]} : vector<16x4xi32> to vector<16x1xi32>
    %6 = vector.broadcast %5 : vector<16x1xi32> to vector<16x128xi32>
    %7 = arith.cmpi eq, %6, %3 : vector<16x128xi32>
    %8 = arith.extui %7 : vector<16x128xi1> to vector<16x128xi32>
    %9 = arith.sitofp %8 : vector<16x128xi32> to vector<16x128xf32>
    %10 = arith.addf %4, %9 : vector<16x128xf32>
    %11 = vector.extract_strided_slice %2 {offsets = [0, 1], sizes = [16, 1], strides = [1, 1]} : vector<16x4xi32> to vector<16x1xi32>
    %12 = vector.broadcast %11 : vector<16x1xi32> to vector<16x128xi32>
    %13 = arith.cmpi eq, %12, %3 : vector<16x128xi32>
    %14 = arith.extui %13 : vector<16x128xi1> to vector<16x128xi32>
    %15 = arith.sitofp %14 : vector<16x128xi32> to vector<16x128xf32>
    %16 = arith.addf %10, %15 : vector<16x128xf32>
    %17 = vector.extract_strided_slice %2 {offsets = [0, 2], sizes = [16, 1], strides = [1, 1]} : vector<16x4xi32> to vector<16x1xi32>
    %18 = vector.broadcast %17 : vector<16x1xi32> to vector<16x128xi32>
    %19 = arith.cmpi eq, %18, %3 : vector<16x128xi32>
    %20 = arith.extui %19 : vector<16x128xi1> to vector<16x128xi32>
    %21 = arith.sitofp %20 : vector<16x128xi32> to vector<16x128xf32>
    %22 = arith.addf %16, %21 : vector<16x128xf32>
    %23 = vector.extract_strided_slice %2 {offsets = [0, 3], sizes = [16, 1], strides = [1, 1]} : vector<16x4xi32> to vector<16x1xi32>
    %24 = vector.broadcast %23 : vector<16x1xi32> to vector<16x128xi32>
    %25 = arith.cmpi eq, %24, %3 : vector<16x128xi32>
    %26 = arith.extui %25 : vector<16x128xi1> to vector<16x128xi32>
    %27 = arith.sitofp %26 : vector<16x128xi32> to vector<16x128xf32>
    %28 = arith.addf %22, %27 : vector<16x128xf32>
    %29 = arith.truncf %28 : vector<16x128xf32> to vector<16x128xbf16>
    %cst_4 = arith.constant dense<0.000000e+00> : vector<16x128xf32>
    %30 = tpu.matmul %29, %0, %cst_4 {dimension_numbers = #tpu.dot_dimension_numbers<[1], [0], [0], [1], [0, 0, 1, 1], [], []>} : vector<16x128xbf16>, vector<128x128xbf16>, vector<16x128xf32> -> vector<16x128xf32>
    %31 = vector.shape_cast %30 : vector<16x128xf32> to vector<2x8x128xf32>
    %c0_5 = arith.constant 0 : index
    %c0_6 = arith.constant 0 : index
    %c0_7 = arith.constant 0 : index
    %32 = vector.load %arg2[%c0_5, %c0_6, %c0_7] : memref<2x8x32xf32, #tpu.memory_space<vmem>>, vector<2x8x32xf32>
    %cst_8 = arith.constant 0.000000e+00 : f32
    %33 = vector.broadcast %cst_8 : f32 to vector<2x1x32xf32>
    %34 = vector.extract_strided_slice %31 {offsets = [0, 0, 0], sizes = [2, 8, 32], strides = [1, 1, 1]} : vector<2x8x128xf32> to vector<2x8x32xf32>
    %35 = arith.addf %34, %32 : vector<2x8x32xf32>
    "tpu.trace_start"() <{level = 10 : i32, message = "bqe,bme->bqm"}> : () -> ()
    %cst_9 = arith.constant dense<0.000000e+00> : vector<2x1x8xf32>
    %36 = tpu.matmul %33, %35, %cst_9 {dimension_numbers = #tpu.dot_dimension_numbers<[2], [2], [1], [1], [0, 0, 0, 1, 1, 1], [0], [0]>} : vector<2x1x32xf32>, vector<2x8x32xf32>, vector<2x1x8xf32> -> vector<2x1x8xf32>
    "tpu.trace_stop"() : () -> ()
    %cst_10 = arith.constant dense<0xFF800000> : vector<2x1xf32>
    %37 = vector.multi_reduction <maximumf>, %36, %cst_10 [2] : vector<2x1x8xf32> to vector<2x1xf32>
    %38 = vector.shape_cast %37 : vector<2x1xf32> to vector<2x1x1xf32>
    %39 = vector.broadcast %38 : vector<2x1x1xf32> to vector<2x1x8xf32>
    %40 = arith.subf %36, %39 : vector<2x1x8xf32>
    %41 = math.exp %40 : vector<2x1x8xf32>
    %cst_11 = arith.constant dense<0.000000e+00> : vector<2x1xf32>
    %42 = vector.multi_reduction <add>, %41, %cst_11 [2] : vector<2x1x8xf32> to vector<2x1xf32>
    %43 = vector.shape_cast %42 : vector<2x1xf32> to vector<2x1x1xf32>
    %44 = tpu.reciprocal %43 {approx = true} : vector<2x1x1xf32> -> vector<2x1x1xf32>
    %45 = vector.broadcast %44 : vector<2x1x1xf32> to vector<2x1x8xf32>
    %46 = arith.mulf %41, %45 : vector<2x1x8xf32>
    %47 = vector.extract_strided_slice %31 {offsets = [0, 0, 32], sizes = [2, 8, 32], strides = [1, 1, 1]} : vector<2x8x128xf32> to vector<2x8x32xf32>
    "tpu.trace_start"() <{level = 10 : i32, message = "bqm,bme->bqe"}> : () -> ()
    %cst_12 = arith.constant dense<0.000000e+00> : vector<2x1x32xf32>
    %48 = tpu.matmul %46, %47, %cst_12 {dimension_numbers = #tpu.dot_dimension_numbers<[2], [1], [1], [2], [0, 0, 0, 1, 1, 2], [0], [0]>} : vector<2x1x8xf32>, vector<2x8x32xf32>, vector<2x1x32xf32> -> vector<2x1x32xf32>
    "tpu.trace_stop"() : () -> ()
    %49 = arith.addf %33, %48 : vector<2x1x32xf32>
    %50 = vector.extract_strided_slice %31 {offsets = [0, 0, 32], sizes = [2, 8, 32], strides = [1, 1, 1]} : vector<2x8x128xf32> to vector<2x8x32xf32>
    "tpu.trace_start"() <{level = 10 : i32, message = "bqe,bme->bqm"}> : () -> ()
    %cst_13 = arith.constant dense<0.000000e+00> : vector<2x1x8xf32>
    %51 = tpu.matmul %49, %50, %cst_13 {dimension_numbers = #tpu.dot_dimension_numbers<[2], [2], [1], [1], [0, 0, 0, 1, 1, 1], [0], [0]>} : vector<2x1x32xf32>, vector<2x8x32xf32>, vector<2x1x8xf32> -> vector<2x1x8xf32>
    "tpu.trace_stop"() : () -> ()
    %cst_14 = arith.constant dense<0xFF800000> : vector<2x1xf32>
    %52 = vector.multi_reduction <maximumf>, %51, %cst_14 [2] : vector<2x1x8xf32> to vector<2x1xf32>
    %53 = vector.shape_cast %52 : vector<2x1xf32> to vector<2x1x1xf32>
    %54 = vector.broadcast %53 : vector<2x1x1xf32> to vector<2x1x8xf32>
    %55 = arith.subf %51, %54 : vector<2x1x8xf32>
    %56 = math.exp %55 : vector<2x1x8xf32>
    %cst_15 = arith.constant dense<0.000000e+00> : vector<2x1xf32>
    %57 = vector.multi_reduction <add>, %56, %cst_15 [2] : vector<2x1x8xf32> to vector<2x1xf32>
    %58 = vector.shape_cast %57 : vector<2x1xf32> to vector<2x1x1xf32>
    %59 = tpu.reciprocal %58 {approx = true} : vector<2x1x1xf32> -> vector<2x1x1xf32>
    %60 = vector.broadcast %59 : vector<2x1x1xf32> to vector<2x1x8xf32>
    %61 = arith.mulf %56, %60 : vector<2x1x8xf32>
    %62 = vector.extract_strided_slice %31 {offsets = [0, 0, 64], sizes = [2, 8, 32], strides = [1, 1, 1]} : vector<2x8x128xf32> to vector<2x8x32xf32>
    "tpu.trace_start"() <{level = 10 : i32, message = "bqm,bme->bqe"}> : () -> ()
    %cst_16 = arith.constant dense<0.000000e+00> : vector<2x1x32xf32>
    %63 = tpu.matmul %61, %62, %cst_16 {dimension_numbers = #tpu.dot_dimension_numbers<[2], [1], [1], [2], [0, 0, 0, 1, 1, 2], [0], [0]>} : vector<2x1x8xf32>, vector<2x8x32xf32>, vector<2x1x32xf32> -> vector<2x1x32xf32>
    "tpu.trace_stop"() : () -> ()
    %64 = arith.addf %49, %63 : vector<2x1x32xf32>
    %65 = vector.extract_strided_slice %31 {offsets = [0, 0, 64], sizes = [2, 8, 32], strides = [1, 1, 1]} : vector<2x8x128xf32> to vector<2x8x32xf32>
    "tpu.trace_start"() <{level = 10 : i32, message = "bqe,bme->bqm"}> : () -> ()
    %cst_17 = arith.constant dense<0.000000e+00> : vector<2x1x8xf32>
    %66 = tpu.matmul %64, %65, %cst_17 {dimension_numbers = #tpu.dot_dimension_numbers<[2], [2], [1], [1], [0, 0, 0, 1, 1, 1], [0], [0]>} : vector<2x1x32xf32>, vector<2x8x32xf32>, vector<2x1x8xf32> -> vector<2x1x8xf32>
    "tpu.trace_stop"() : () -> ()
    %cst_18 = arith.constant dense<0xFF800000> : vector<2x1xf32>
    %67 = vector.multi_reduction <maximumf>, %66, %cst_18 [2] : vector<2x1x8xf32> to vector<2x1xf32>
    %68 = vector.shape_cast %67 : vector<2x1xf32> to vector<2x1x1xf32>
    %69 = vector.broadcast %68 : vector<2x1x1xf32> to vector<2x1x8xf32>
    %70 = arith.subf %66, %69 : vector<2x1x8xf32>
    %71 = math.exp %70 : vector<2x1x8xf32>
    %cst_19 = arith.constant dense<0.000000e+00> : vector<2x1xf32>
    %72 = vector.multi_reduction <add>, %71, %cst_19 [2] : vector<2x1x8xf32> to vector<2x1xf32>
    %73 = vector.shape_cast %72 : vector<2x1xf32> to vector<2x1x1xf32>
    %74 = tpu.reciprocal %73 {approx = true} : vector<2x1x1xf32> -> vector<2x1x1xf32>
    %75 = vector.broadcast %74 : vector<2x1x1xf32> to vector<2x1x8xf32>
    %76 = arith.mulf %71, %75 : vector<2x1x8xf32>
    %77 = vector.extract_strided_slice %31 {offsets = [0, 0, 96], sizes = [2, 8, 32], strides = [1, 1, 1]} : vector<2x8x128xf32> to vector<2x8x32xf32>
    "tpu.trace_start"() <{level = 10 : i32, message = "bqm,bme->bqe"}> : () -> ()
    %cst_20 = arith.constant dense<0.000000e+00> : vector<2x1x32xf32>
    %78 = tpu.matmul %76, %77, %cst_20 {dimension_numbers = #tpu.dot_dimension_numbers<[2], [1], [1], [2], [0, 0, 0, 1, 1, 2], [0], [0]>} : vector<2x1x8xf32>, vector<2x8x32xf32>, vector<2x1x32xf32> -> vector<2x1x32xf32>
    "tpu.trace_stop"() : () -> ()
    %79 = arith.addf %64, %78 : vector<2x1x32xf32>
    %80 = vector.shape_cast %79 : vector<2x1x32xf32> to vector<2x32xf32>
    %cst_21 = arith.constant 0.000000e+00 : f32
    %81 = vector.broadcast %cst_21 : f32 to vector<2x96xf32>
    %82 = tpu.concatenate %80, %81 in 1 : vector<2x32xf32>, vector<2x96xf32> -> vector<2x128xf32>
    %c0_22 = arith.constant 0 : index
    %c0_23 = arith.constant 0 : index
    %83 = vector.load %arg4[%c0_22, %c0_23] : memref<2x128xf32, #tpu.memory_space<vmem>>, vector<2x128xf32>
    tpu.vector_store %arg4[%c0_22, %c0_23], %82 {strides = array<i32>} : memref<2x128xf32, #tpu.memory_space<vmem>>, vector<2x128xf32>,
    return
  }
  func.func @transform_0(%arg0: i32) -> (i32, i32, i32) {
    %c0_i32 = arith.constant 0 : i32
    %c0_i32_0 = arith.constant 0 : i32
    %c0_i32_1 = arith.constant 0 : i32
    return %arg0, %c0_i32, %c0_i32_0 : i32, i32, i32
  }
  func.func @transform_1(%arg0: i32) -> (i32, i32, i32) {
    %c0_i32 = arith.constant 0 : i32
    %c0_i32_0 = arith.constant 0 : i32
    %c0_i32_1 = arith.constant 0 : i32
    return %arg0, %c0_i32, %c0_i32_0 : i32, i32, i32
  }
  func.func @transform_2(%arg0: i32) -> (i32, i32) {
    %c0_i32 = arith.constant 0 : i32
    %c0_i32_0 = arith.constant 0 : i32
    %c0_i32_1 = arith.constant 0 : i32
    return %c0_i32, %c0_i32_0 : i32, i32
  }
  func.func @transform_3(%arg0: i32) -> (i32, i32) {
    %c0_i32 = arith.constant 0 : i32
    %c0_i32_0 = arith.constant 0 : i32
    return %arg0, %c0_i32 : i32, i32
  }
}

</mosaic_0001>

<llo_original>
// kernel: tpu_custom_call.1
$region0: #{tpu_custom_call.1}
  #allocation0 [shape = 'u32[]', space=smem, size = 0x4, offset = 0x4, fixed_abs, tag = 'smem constant byte address 0x4 - core index']
  #allocation1 [shape = 'u32[144,128]{1,0:T(1,128)}', space=vmem, size = 0x12000, scoped, tag = 'internal scratch']
  %s0 = inlined_call_operand.vmem [shape: s32[2,8,4], index: 0, kind: input, shape index: {}]
  %s1 = inlined_call_operand.vmem [shape: f32[2,8,32], index: 1, kind: input, shape index: {}]
  %s2 = inlined_call_operand.hbm [shape: bf16[128,128], index: 2, kind: input, shape index: {}]
  %s3 = inlined_call_operand.hbm [shape: f32[2,128], index: 3, kind: output, shape index: {}]
  %s4 = sld [smem:[#allocation0]]
  $region26: #{tpu_custom_call.1} parent=0
    _
  %s6 = ssub.s32 1, %s4
  %s7 = scalar_select 0, %s6, %s4
  $region1: #{tpu_custom_call.1} parent=0
    #allocation2 [shape = 'u8[32768]{0}', space=vmem, size = 0x8000, scoped, tag = 'input window, operand 2, single buffered']
    #allocation3 [shape = 's32[1]{0}', space=sflag, size = 0x4, scoped, tag = 'scoped memory for tpu_custom_call.1']
    #allocation4 [shape = 's32[1]{0}', space=sflag, size = 0x4, scoped, tag = 'scoped memory for tpu_custom_call.1']
    #allocation5 [shape = 'u8[1024]{0}', space=vmem, size = 0x400, scoped, tag = 'output window, operand 0, single buffered']
    %8 = vsyncpa [#allocation3], 0
    %9 = vsyncpa [#allocation4], 0
    // Predicated region
    $region2: #{tpu_custom_call.1} parent=1 // pred_check
      _
    $region3: #{tpu_custom_call.1} parent=1 // pred_check_branch
      %11 = sbr.rel (0) target = $region5
    $region4: #{tpu_custom_call.1} parent=1 // pred_region
      _
    $region5: #{tpu_custom_call.1} parent=1 // pred_fallthru
      _
    // Predicated region
    $region6: #{tpu_custom_call.1} parent=1 // pred_check
      _
    $region7: #{tpu_custom_call.1} parent=1 // pred_check_branch
      %13 = sbr.rel (0) target = $region9
    $region8: #{tpu_custom_call.1} parent=1 // pred_region
      _
    $region9: #{tpu_custom_call.1} parent=1 // pred_fallthru
      _
    // Predicated region
    $region10: #{tpu_custom_call.1} parent=1 // pred_check
      _
    $region11: #{tpu_custom_call.1} parent=1 // pred_check_branch
      %15 = sbr.rel (0) target = $region13
    $region12: #{tpu_custom_call.1} parent=1 // pred_region
      %s17 = ssub.s32 1024, 1024
      %18 = vsyncadd [#allocation3], %s17
      %s19 = sshll.u32 [#allocation2], 4
      %s20 = int_to_ptr.vmem [resolvable:$true] %s19
      %25 = dma.hbm_to_vmem [thread:$0]  %s2, 1024, %s20, [#allocation3], 64, 64, 4
    $region13: #{tpu_custom_call.1} parent=1 // pred_fallthru
      _
    // Predicated region
    $region14: #{tpu_custom_call.1} parent=1 // pred_check
      _
    $region15: #{tpu_custom_call.1} parent=1 // pred_check_branch
      %27 = sbr.rel (0) target = $region17
    $region16: #{tpu_custom_call.1} parent=1 // pred_region
      %28 = dma.done [#allocation3], 1024
    $region17: #{tpu_custom_call.1} parent=1 // pred_fallthru
      _
    %v30 = vld [vmem:[#allocation2] sm:$0xf]
    %v31 = vld [vmem:[#allocation2 + $0x4] sm:$0xf]
    %v32 = vld [vmem:[#allocation2 + $0x8] sm:$0xf]
    %v33 = vld [vmem:[#allocation2 + $0xc] sm:$0xf]
    %v34 = vld [vmem:[#allocation2 + $0x10] sm:$0xf]
    %v35 = vld [vmem:[#allocation2 + $0x14] sm:$0xf]
    %v36 = vld [vmem:[#allocation2 + $0x18] sm:$0xf]
    %v37 = vld [vmem:[#allocation2 + $0x1c] sm:$0xf]
    %v38 = vld [vmem:[#allocation2 + $0x20] sm:$0xf]
    %v39 = vld [vmem:[#allocation2 + $0x24] sm:$0xf]
    %v40 = vld [vmem:[#allocation2 + $0x28] sm:$0xf]
    %v41 = vld [vmem:[#allocation2 + $0x2c] sm:$0xf]
    %v42 = vld [vmem:[#allocation2 + $0x30] sm:$0xf]
    %v43 = vld [vmem:[#allocation2 + $0x34] sm:$0xf]
    %v44 = vld [vmem:[#allocation2 + $0x38] sm:$0xf]
    %v45 = vld [vmem:[#allocation2 + $0x3c] sm:$0xf]
    %v46 = vld [vmem:[%s0] sm:$0xff]
    %v47 = vld [vmem:[%s0 + $0x8] sm:$0xff]
    %v48 = vlaneseq
    %v49 = vand.u32 %v48, 127
    %50 = vset.pattern.permute.xlu0 0
    %51 = vperm.xlu0 %50, %v46
    %v52 = vpop.permute.xlu0 %51
    %53 = vset.pattern.permute.xlu0 0
    %54 = vperm.xlu0 %53, %v47
    %v55 = vpop.permute.xlu0 %54
    %vm56 = vcmp.eq.s32.totalorder %v52, %v49
    %vm57 = vcmp.eq.s32.totalorder %v55, %v49
    %v58 = vsel %vm56, 1, 0
    %v59 = vsel %vm57, 1, 0
    %v60 = vcvt.s32.f32 %v58
    %v61 = vcvt.s32.f32 %v59
    %v62 = vadd.f32 %v60, 0.0
    %v63 = vadd.f32 %v61, 0.0
    %64 = vset.pattern.permute.xlu0 1
    %65 = vperm.xlu0 %64, %v46
    %v66 = vpop.permute.xlu0 %65
    %67 = vset.pattern.permute.xlu0 1
    %68 = vperm.xlu0 %67, %v47
    %v69 = vpop.permute.xlu0 %68
    %vm70 = vcmp.eq.s32.totalorder %v66, %v49
    %vm71 = vcmp.eq.s32.totalorder %v69, %v49
    %v72 = vsel %vm70, 1, 0
    %v73 = vsel %vm71, 1, 0
    %v74 = vcvt.s32.f32 %v72
    %v75 = vcvt.s32.f32 %v73
    %v76 = vadd.f32 %v62, %v74
    %v77 = vadd.f32 %v63, %v75
    %78 = vset.pattern.permute.xlu0 2
    %79 = vperm.xlu0 %78, %v46
    %v80 = vpop.permute.xlu0 %79
    %81 = vset.pattern.permute.xlu0 2
    %82 = vperm.xlu0 %81, %v47
    %v83 = vpop.permute.xlu0 %82
    %vm84 = vcmp.eq.s32.totalorder %v80, %v49
    %vm85 = vcmp.eq.s32.totalorder %v83, %v49
    %v86 = vsel %vm84, 1, 0
    %v87 = vsel %vm85, 1, 0
    %v88 = vcvt.s32.f32 %v86
    %v89 = vcvt.s32.f32 %v87
    %v90 = vadd.f32 %v76, %v88
    %v91 = vadd.f32 %v77, %v89
    %92 = vset.pattern.permute.xlu0 3
    %93 = vperm.xlu0 %92, %v46
    %v94 = vpop.permute.xlu0 %93
    %95 = vset.pattern.permute.xlu0 3
    %96 = vperm.xlu0 %95, %v47
    %v97 = vpop.permute.xlu0 %96
    %vm98 = vcmp.eq.s32.totalorder %v94, %v49
    %vm99 = vcmp.eq.s32.totalorder %v97, %v49
    %v100 = vsel %vm98, 1, 0
    %v101 = vsel %vm99, 1, 0
    %v102 = vcvt.s32.f32 %v100
    %v103 = vcvt.s32.f32 %v101
    %v104 = vadd.f32 %v90, %v102
    %v105 = vadd.f32 %v91, %v103
    %v106 = vpack.c.bf16 %v105, %v104
    %v123 = vunpack.c.l.b16 %v30
    %v124 = vunpack.c.l.b16 %v31
    %v125 = vunpack.c.l.b16 %v32
    %v126 = vunpack.c.l.b16 %v33
    %v127 = vunpack.c.l.b16 %v34
    %v128 = vunpack.c.l.b16 %v35
    %v129 = vunpack.c.l.b16 %v36
    %v130 = vunpack.c.l.b16 %v37
    %v131 = vunpack.c.l.b16 %v38
    %v132 = vunpack.c.l.b16 %v39
    %v133 = vunpack.c.l.b16 %v40
    %v134 = vunpack.c.l.b16 %v41
    %v135 = vunpack.c.l.b16 %v42
    %v136 = vunpack.c.l.b16 %v43
    %v137 = vunpack.c.l.b16 %v44
    %v138 = vunpack.c.l.b16 %v45
    %v139 = vpack.c.b16 %v124, %v123
    %v140 = vpack.c.b16 %v126, %v125
    %v141 = vpack.c.b16 %v128, %v127
    %v142 = vpack.c.b16 %v130, %v129
    %v143 = vpack.c.b16 %v132, %v131
    %v144 = vpack.c.b16 %v134, %v133
    %v145 = vpack.c.b16 %v136, %v135
    %v146 = vpack.c.b16 %v138, %v137
    %155 = vmatprep.subr.bf16.mxu0 0
    %156 = vmatpush1.bf16.msra.mxu0 %v139
    %157 = vmatprep.subr.bf16.mxu0 0
    %158 = vmatpush1.bf16.msra.mxu0 %v140
    %159 = vmatprep.subr.bf16.mxu0 0
    %160 = vmatpush1.bf16.msra.mxu0 %v141
    %161 = vmatprep.subr.bf16.mxu0 0
    %162 = vmatpush1.bf16.msra.mxu0 %v142
    %163 = vmatprep.subr.bf16.mxu0 0
    %164 = vmatpush1.bf16.msra.mxu0 %v143
    %165 = vmatprep.subr.bf16.mxu0 0
    %166 = vmatpush1.bf16.msra.mxu0 %v144
    %167 = vmatprep.subr.bf16.mxu0 0
    %168 = vmatpush1.bf16.msra.mxu0 %v145
    %169 = vmatprep.subr.bf16.mxu0 0
    %170 = vmatpush1.bf16.msra.mxu0 %v146
    %171 = vmatprep.subr.bf16.mxu0 0
    %172 = vmatpush1.bf16.msra.mxu0 0
    %173 = vmatprep.subr.bf16.mxu0 0
    %174 = vmatpush1.bf16.msra.mxu0 0
    %175 = vmatprep.subr.bf16.mxu0 0
    %176 = vmatpush1.bf16.msra.mxu0 0
    %177 = vmatprep.subr.bf16.mxu0 0
    %178 = vmatpush1.bf16.msra.mxu0 0
    %179 = vmatprep.subr.bf16.mxu0 0
    %180 = vmatpush1.bf16.msra.mxu0 0
    %181 = vmatprep.subr.bf16.mxu0 0
    %182 = vmatpush1.bf16.msra.mxu0 0
    %183 = vmatprep.subr.bf16.mxu0 0
    %184 = vmatpush1.bf16.msra.mxu0 0
    %185 = vmatprep.subr.bf16.mxu0 0
    %186 = vmatpush1.bf16.msra.mxu0 0
    %187 = vmatprep.mubr.bf16.mxu0 0
    %188 = vmatmul.mubr.bf16.gmra.mrb[0].mxu0 %v106
    %v189 = vpop.f32.mrb[0].mxu0
    %v190 = vadd.f32 0.0, %v189
    %v191 = vpop.f32.mrb[0].mxu0
    %v192 = vpop.f32.mrb[0].mxu0
    %v193 = vadd.f32 0.0, %v192
    %v194 = vpop.f32.mrb[0].mxu0
    %195 = vdwg.mxu0
    %v196 = vld [vmem:[%s1] sm:$0xff]
    %v197 = vld [vmem:[%s1 + $0x8] sm:$0xff]
    %v198 = vadd.f32 %v190, %v196
    %v199 = vadd.f32 %v193, %v197
    %vm200 = vcmask 261120
    %v202 = vsel %vm200, 0.0, 0
    %v205 = vsel %vm200, %v198, 0
    %207 = vmatprep.subr.mxu0 0.0
    %208 = vmatpush1.xpose.msra.mxu0 %v205
    %209 = vmatprep.subr.mxu0 0.0
    %210 = vmatpush1.xpose.msra.mxu0 0.0
    %211 = vmatprep.subr.mxu0 0.0
    %212 = vmatpush1.xpose.msra.mxu0 0.0
    %213 = vmatprep.subr.mxu0 0.0
    %214 = vmatpush1.xpose.msra.mxu0 0.0
    %215 = vmatprep.subr.mxu0 0.0
    %216 = vmatpush1.xpose.msra.mxu0 0.0
    %217 = vmatprep.subr.mxu0 0.0
    %218 = vmatpush1.xpose.msra.mxu0 0.0
    %219 = vmatprep.subr.mxu0 0.0
    %220 = vmatpush1.xpose.msra.mxu0 0.0
    %221 = vmatprep.subr.mxu0 0.0
    %222 = vmatpush1.xpose.msra.mxu0 0.0
    %223 = vmatprep.subr.mxu0 0.0
    %224 = vmatpush1.xpose.msra.mxu0 0.0
    %225 = vmatprep.subr.mxu0 0.0
    %226 = vmatpush1.xpose.msra.mxu0 0.0
    %227 = vmatprep.subr.mxu0 0.0
    %228 = vmatpush1.xpose.msra.mxu0 0.0
    %229 = vmatprep.subr.mxu0 0.0
    %230 = vmatpush1.xpose.msra.mxu0 0.0
    %231 = vmatprep.subr.mxu0 0.0
    %232 = vmatpush1.xpose.msra.mxu0 0.0
    %233 = vmatprep.subr.mxu0 0.0
    %234 = vmatpush1.xpose.msra.mxu0 0.0
    %235 = vmatprep.subr.mxu0 0.0
    %236 = vmatpush1.xpose.msra.mxu0 0.0
    %237 = vmatprep.subr.mxu0 0.0
    %238 = vmatpush1.xpose.msra.mxu0 0.0
    %239 = vmatprep.subr.mxu0 0.0
    %240 = vmatpush1.xpose.msra.mxu0 0.0
    %241 = vmatprep.subr.mxu0 0.0
    %242 = vmatpush1.xpose.msra.mxu0 0.0
    %243 = vmatprep.subr.mxu0 0.0
    %244 = vmatpush1.xpose.msra.mxu0 0.0
    %245 = vmatprep.subr.mxu0 0.0
    %246 = vmatpush1.xpose.msra.mxu0 0.0
    %247 = vmatprep.subr.mxu0 0.0
    %248 = vmatpush1.xpose.msra.mxu0 0.0
    %249 = vmatprep.subr.mxu0 0.0
    %250 = vmatpush1.xpose.msra.mxu0 0.0
    %251 = vmatprep.subr.mxu0 0.0
    %252 = vmatpush1.xpose.msra.mxu0 0.0
    %253 = vmatprep.subr.mxu0 0.0
    %254 = vmatpush1.xpose.msra.mxu0 0.0
    %255 = vmatprep.subr.mxu0 0.0
    %256 = vmatpush1.xpose.msra.mxu0 0.0
    %257 = vmatprep.subr.mxu0 0.0
    %258 = vmatpush1.xpose.msra.mxu0 0.0
    %259 = vmatprep.subr.mxu0 0.0
    %260 = vmatpush1.xpose.msra.mxu0 0.0
    %261 = vmatprep.subr.mxu0 0.0
    %262 = vmatpush1.xpose.msra.mxu0 0.0
    %263 = vmatprep.subr.mxu0 0.0
    %264 = vmatpush1.xpose.msra.mxu0 0.0
    %265 = vmatprep.subr.mxu0 0.0
    %266 = vmatpush1.xpose.msra.mxu0 0.0
    %267 = vmatprep.subr.mxu0 0.0
    %268 = vmatpush1.xpose.msra.mxu0 0.0
    %269 = vmatprep.subr.mxu0 0.0
    %270 = vmatpush1.xpose.msra.mxu0 0.0
    %271 = vmatprep.mubr.f32.mxu0 0.0
    %272 = vmatmul.mubr.f32.gmra.mrb[0].mxu0 %v202
    %v273 = vpop.f32.mrb[0].mxu0
    %v274 = vadd.f32 0.0, %v273
    %v275 = vpop.f32.mrb[0].mxu0
    %276 = vdwg.mxu0
    %v278 = vsel %vm200, %v199, 0
    %280 = vmatprep.subr.mxu0 0.0
    %281 = vmatpush1.xpose.msra.mxu0 %v278
    %282 = vmatprep.subr.mxu0 0.0
    %283 = vmatpush1.xpose.msra.mxu0 0.0
    %284 = vmatprep.subr.mxu0 0.0
    %285 = vmatpush1.xpose.msra.mxu0 0.0
    %286 = vmatprep.subr.mxu0 0.0
    %287 = vmatpush1.xpose.msra.mxu0 0.0
    %288 = vmatprep.subr.mxu0 0.0
    %289 = vmatpush1.xpose.msra.mxu0 0.0
    %290 = vmatprep.subr.mxu0 0.0
    %291 = vmatpush1.xpose.msra.mxu0 0.0
    %292 = vmatprep.subr.mxu0 0.0
    %293 = vmatpush1.xpose.msra.mxu0 0.0
    %294 = vmatprep.subr.mxu0 0.0
    %295 = vmatpush1.xpose.msra.mxu0 0.0
    %296 = vmatprep.subr.mxu0 0.0
    %297 = vmatpush1.xpose.msra.mxu0 0.0
    %298 = vmatprep.subr.mxu0 0.0
    %299 = vmatpush1.xpose.msra.mxu0 0.0
    %300 = vmatprep.subr.mxu0 0.0
    %301 = vmatpush1.xpose.msra.mxu0 0.0
    %302 = vmatprep.subr.mxu0 0.0
    %303 = vmatpush1.xpose.msra.mxu0 0.0
    %304 = vmatprep.subr.mxu0 0.0
    %305 = vmatpush1.xpose.msra.mxu0 0.0
    %306 = vmatprep.subr.mxu0 0.0
    %307 = vmatpush1.xpose.msra.mxu0 0.0
    %308 = vmatprep.subr.mxu0 0.0
    %309 = vmatpush1.xpose.msra.mxu0 0.0
    %310 = vmatprep.subr.mxu0 0.0
    %311 = vmatpush1.xpose.msra.mxu0 0.0
    %312 = vmatprep.subr.mxu0 0.0
    %313 = vmatpush1.xpose.msra.mxu0 0.0
    %314 = vmatprep.subr.mxu0 0.0
    %315 = vmatpush1.xpose.msra.mxu0 0.0
    %316 = vmatprep.subr.mxu0 0.0
    %317 = vmatpush1.xpose.msra.mxu0 0.0
    %318 = vmatprep.subr.mxu0 0.0
    %319 = vmatpush1.xpose.msra.mxu0 0.0
    %320 = vmatprep.subr.mxu0 0.0
    %321 = vmatpush1.xpose.msra.mxu0 0.0
    %322 = vmatprep.subr.mxu0 0.0
    %323 = vmatpush1.xpose.msra.mxu0 0.0
    %324 = vmatprep.subr.mxu0 0.0
    %325 = vmatpush1.xpose.msra.mxu0 0.0
    %326 = vmatprep.subr.mxu0 0.0
    %327 = vmatpush1.xpose.msra.mxu0 0.0
    %328 = vmatprep.subr.mxu0 0.0
    %329 = vmatpush1.xpose.msra.mxu0 0.0
    %330 = vmatprep.subr.mxu0 0.0
    %331 = vmatpush1.xpose.msra.mxu0 0.0
    %332 = vmatprep.subr.mxu0 0.0
    %333 = vmatpush1.xpose.msra.mxu0 0.0
    %334 = vmatprep.subr.mxu0 0.0
    %335 = vmatpush1.xpose.msra.mxu0 0.0
    %336 = vmatprep.subr.mxu0 0.0
    %337 = vmatpush1.xpose.msra.mxu0 0.0
    %338 = vmatprep.subr.mxu0 0.0
    %339 = vmatpush1.xpose.msra.mxu0 0.0
    %340 = vmatprep.subr.mxu0 0.0
    %341 = vmatpush1.xpose.msra.mxu0 0.0
    %342 = vmatprep.subr.mxu0 0.0
    %343 = vmatpush1.xpose.msra.mxu0 0.0
    %344 = vmatprep.mubr.f32.mxu0 0.0
    %345 = vmatmul.mubr.f32.gmra.mrb[0].mxu0 %v202
    %v346 = vpop.f32.mrb[0].mxu0
    %v347 = vadd.f32 0.0, %v346
    %v348 = vpop.f32.mrb[0].mxu0
    %349 = vdwg.mxu0
    %vm350 = vcmask 57344
    %v351 = vsel %vm350, %v274, -inf
    %352 = vmax.xlane.f32.xlu0 %v351
    %v353 = vpop.xlane.xlu0 %352
    %v354 = vsel %vm350, %v347, -inf
    %355 = vmax.xlane.f32.xlu0 %v354
    %v356 = vpop.xlane.xlu0 %355
    %v357 = vsub.f32 %v274, %v353
    %v358 = vsub.f32 %v347, %v356
    %v359 = vmul.f32 %v357, 1.442695
    %v360 = vpow.pop %v359
    %v361 = vmul.f32 %v358, 1.442695
    %v362 = vpow.pop %v361
    %v363 = vsel %vm350, %v360, 0.0
    %364 = vadd.xlane.f32.xlu0 %v363
    %v365 = vpop.xlane.xlu0 %364
    %v366 = vsel %vm350, %v362, 0.0
    %367 = vadd.xlane.f32.xlu0 %v366
    %v368 = vpop.xlane.xlu0 %367
    %v369 = vrcp.pop %v365
    %v370 = vrcp.pop %v368
    %v371 = vmul.f32 %v360, %v369
    %v372 = vmul.f32 %v362, %v370
    %374 = vrot.lane.b32.xlu0 %v190, 96
    %v375 = vpop.permute.xlu0 %374
    %vm377 = vcmask 64512
    %v379 = vsel %vm377, %v371, 0
    %381 = vmatprep.subr.mxu0 0.0
    %382 = vmatpush1.msra.mxu0 %v375
    %383 = vmatprep.subr.mxu0 0.0
    %384 = vmatpush1.msra.mxu0 0.0
    %385 = vmatprep.subr.mxu0 0.0
    %386 = vmatpush1.msra.mxu0 0.0
    %387 = vmatprep.subr.mxu0 0.0
    %388 = vmatpush1.msra.mxu0 0.0
    %389 = vmatprep.subr.mxu0 0.0
    %390 = vmatpush1.msra.mxu0 0.0
    %391 = vmatprep.subr.mxu0 0.0
    %392 = vmatpush1.msra.mxu0 0.0
    %393 = vmatprep.subr.mxu0 0.0
    %394 = vmatpush1.msra.mxu0 0.0
    %395 = vmatprep.subr.mxu0 0.0
    %396 = vmatpush1.msra.mxu0 0.0
    %397 = vmatprep.subr.mxu0 0.0
    %398 = vmatpush1.msra.mxu0 0.0
    %399 = vmatprep.subr.mxu0 0.0
    %400 = vmatpush1.msra.mxu0 0.0
    %401 = vmatprep.subr.mxu0 0.0
    %402 = vmatpush1.msra.mxu0 0.0
    %403 = vmatprep.subr.mxu0 0.0
    %404 = vmatpush1.msra.mxu0 0.0
    %405 = vmatprep.subr.mxu0 0.0
    %406 = vmatpush1.msra.mxu0 0.0
    %407 = vmatprep.subr.mxu0 0.0
    %408 = vmatpush1.msra.mxu0 0.0
    %409 = vmatprep.subr.mxu0 0.0
    %410 = vmatpush1.msra.mxu0 0.0
    %411 = vmatprep.subr.mxu0 0.0
    %412 = vmatpush1.msra.mxu0 0.0
    %413 = vmatprep.subr.mxu0 0.0
    %414 = vmatpush1.msra.mxu0 0.0
    %415 = vmatprep.subr.mxu0 0.0
    %416 = vmatpush1.msra.mxu0 0.0
    %417 = vmatprep.subr.mxu0 0.0
    %418 = vmatpush1.msra.mxu0 0.0
    %419 = vmatprep.subr.mxu0 0.0
    %420 = vmatpush1.msra.mxu0 0.0
    %421 = vmatprep.subr.mxu0 0.0
    %422 = vmatpush1.msra.mxu0 0.0
    %423 = vmatprep.subr.mxu0 0.0
    %424 = vmatpush1.msra.mxu0 0.0
    %425 = vmatprep.subr.mxu0 0.0
    %426 = vmatpush1.msra.mxu0 0.0
    %427 = vmatprep.subr.mxu0 0.0
    %428 = vmatpush1.msra.mxu0 0.0
    %429 = vmatprep.subr.mxu0 0.0
    %430 = vmatpush1.msra.mxu0 0.0
    %431 = vmatprep.subr.mxu0 0.0
    %432 = vmatpush1.msra.mxu0 0.0
    %433 = vmatprep.subr.mxu0 0.0
    %434 = vmatpush1.msra.mxu0 0.0
    %435 = vmatprep.subr.mxu0 0.0
    %436 = vmatpush1.msra.mxu0 0.0
    %437 = vmatprep.subr.mxu0 0.0
    %438 = vmatpush1.msra.mxu0 0.0
    %439 = vmatprep.subr.mxu0 0.0
    %440 = vmatpush1.msra.mxu0 0.0
    %441 = vmatprep.subr.mxu0 0.0
    %442 = vmatpush1.msra.mxu0 0.0
    %443 = vmatprep.subr.mxu0 0.0
    %444 = vmatpush1.msra.mxu0 0.0
    %445 = vmatprep.mubr.f32.mxu0 0.0
    %446 = vmatmul.mubr.f32.gmra.mrb[0].mxu0 %v379
    %v447 = vpop.f32.mrb[0].mxu0
    %v448 = vadd.f32 0.0, %v447
    %v449 = vpop.f32.mrb[0].mxu0
    %450 = vdwg.mxu0
    %452 = vrot.lane.b32.xlu0 %v193, 96
    %v453 = vpop.permute.xlu0 %452
    %v456 = vsel %vm377, %v372, 0
    %458 = vmatprep.subr.mxu0 0.0
    %459 = vmatpush1.msra.mxu0 %v453
    %460 = vmatprep.subr.mxu0 0.0
    %461 = vmatpush1.msra.mxu0 0.0
    %462 = vmatprep.subr.mxu0 0.0
    %463 = vmatpush1.msra.mxu0 0.0
    %464 = vmatprep.subr.mxu0 0.0
    %465 = vmatpush1.msra.mxu0 0.0
    %466 = vmatprep.subr.mxu0 0.0
    %467 = vmatpush1.msra.mxu0 0.0
    %468 = vmatprep.subr.mxu0 0.0
    %469 = vmatpush1.msra.mxu0 0.0
    %470 = vmatprep.subr.mxu0 0.0
    %471 = vmatpush1.msra.mxu0 0.0
    %472 = vmatprep.subr.mxu0 0.0
    %473 = vmatpush1.msra.mxu0 0.0
    %474 = vmatprep.subr.mxu0 0.0
    %475 = vmatpush1.msra.mxu0 0.0
    %476 = vmatprep.subr.mxu0 0.0
    %477 = vmatpush1.msra.mxu0 0.0
    %478 = vmatprep.subr.mxu0 0.0
    %479 = vmatpush1.msra.mxu0 0.0
    %480 = vmatprep.subr.mxu0 0.0
    %481 = vmatpush1.msra.mxu0 0.0
    %482 = vmatprep.subr.mxu0 0.0
    %483 = vmatpush1.msra.mxu0 0.0
    %484 = vmatprep.subr.mxu0 0.0
    %485 = vmatpush1.msra.mxu0 0.0
    %486 = vmatprep.subr.mxu0 0.0
    %487 = vmatpush1.msra.mxu0 0.0
    %488 = vmatprep.subr.mxu0 0.0
    %489 = vmatpush1.msra.mxu0 0.0
    %490 = vmatprep.subr.mxu0 0.0
    %491 = vmatpush1.msra.mxu0 0.0
    %492 = vmatprep.subr.mxu0 0.0
    %493 = vmatpush1.msra.mxu0 0.0
    %494 = vmatprep.subr.mxu0 0.0
    %495 = vmatpush1.msra.mxu0 0.0
    %496 = vmatprep.subr.mxu0 0.0
    %497 = vmatpush1.msra.mxu0 0.0
    %498 = vmatprep.subr.mxu0 0.0
    %499 = vmatpush1.msra.mxu0 0.0
    %500 = vmatprep.subr.mxu0 0.0
    %501 = vmatpush1.msra.mxu0 0.0
    %502 = vmatprep.subr.mxu0 0.0
    %503 = vmatpush1.msra.mxu0 0.0
    %504 = vmatprep.subr.mxu0 0.0
    %505 = vmatpush1.msra.mxu0 0.0
    %506 = vmatprep.subr.mxu0 0.0
    %507 = vmatpush1.msra.mxu0 0.0
    %508 = vmatprep.subr.mxu0 0.0
    %509 = vmatpush1.msra.mxu0 0.0
    %510 = vmatprep.subr.mxu0 0.0
    %511 = vmatpush1.msra.mxu0 0.0
    %512 = vmatprep.subr.mxu0 0.0
    %513 = vmatpush1.msra.mxu0 0.0
    %514 = vmatprep.subr.mxu0 0.0
    %515 = vmatpush1.msra.mxu0 0.0
    %516 = vmatprep.subr.mxu0 0.0
    %517 = vmatpush1.msra.mxu0 0.0
    %518 = vmatprep.subr.mxu0 0.0
    %519 = vmatpush1.msra.mxu0 0.0
    %520 = vmatprep.subr.mxu0 0.0
    %521 = vmatpush1.msra.mxu0 0.0
    %522 = vmatprep.mubr.f32.mxu0 0.0
    %523 = vmatmul.mubr.f32.gmra.mrb[0].mxu0 %v456
    %v524 = vpop.f32.mrb[0].mxu0
    %v525 = vadd.f32 0.0, %v524
    %v526 = vpop.f32.mrb[0].mxu0
    %527 = vdwg.mxu0
    %v529 = vsel %vm200, %v448, 0
    %v531 = vsel %vm200, %v375, 0
    %533 = vmatprep.subr.mxu0 0.0
    %534 = vmatpush1.xpose.msra.mxu0 %v531
    %535 = vmatprep.subr.mxu0 0.0
    %536 = vmatpush1.xpose.msra.mxu0 0.0
    %537 = vmatprep.subr.mxu0 0.0
    %538 = vmatpush1.xpose.msra.mxu0 0.0
    %539 = vmatprep.subr.mxu0 0.0
    %540 = vmatpush1.xpose.msra.mxu0 0.0
    %541 = vmatprep.subr.mxu0 0.0
    %542 = vmatpush1.xpose.msra.mxu0 0.0
    %543 = vmatprep.subr.mxu0 0.0
    %544 = vmatpush1.xpose.msra.mxu0 0.0
    %545 = vmatprep.subr.mxu0 0.0
    %546 = vmatpush1.xpose.msra.mxu0 0.0
    %547 = vmatprep.subr.mxu0 0.0
    %548 = vmatpush1.xpose.msra.mxu0 0.0
    %549 = vmatprep.subr.mxu0 0.0
    %550 = vmatpush1.xpose.msra.mxu0 0.0
    %551 = vmatprep.subr.mxu0 0.0
    %552 = vmatpush1.xpose.msra.mxu0 0.0
    %553 = vmatprep.subr.mxu0 0.0
    %554 = vmatpush1.xpose.msra.mxu0 0.0
    %555 = vmatprep.subr.mxu0 0.0
    %556 = vmatpush1.xpose.msra.mxu0 0.0
    %557 = vmatprep.subr.mxu0 0.0
    %558 = vmatpush1.xpose.msra.mxu0 0.0
    %559 = vmatprep.subr.mxu0 0.0
    %560 = vmatpush1.xpose.msra.mxu0 0.0
    %561 = vmatprep.subr.mxu0 0.0
    %562 = vmatpush1.xpose.msra.mxu0 0.0
    %563 = vmatprep.subr.mxu0 0.0
    %564 = vmatpush1.xpose.msra.mxu0 0.0
    %565 = vmatprep.subr.mxu0 0.0
    %566 = vmatpush1.xpose.msra.mxu0 0.0
    %567 = vmatprep.subr.mxu0 0.0
    %568 = vmatpush1.xpose.msra.mxu0 0.0
    %569 = vmatprep.subr.mxu0 0.0
    %570 = vmatpush1.xpose.msra.mxu0 0.0
    %571 = vmatprep.subr.mxu0 0.0
    %572 = vmatpush1.xpose.msra.mxu0 0.0
    %573 = vmatprep.subr.mxu0 0.0
    %574 = vmatpush1.xpose.msra.mxu0 0.0
    %575 = vmatprep.subr.mxu0 0.0
    %576 = vmatpush1.xpose.msra.mxu0 0.0
    %577 = vmatprep.subr.mxu0 0.0
    %578 = vmatpush1.xpose.msra.mxu0 0.0
    %579 = vmatprep.subr.mxu0 0.0
    %580 = vmatpush1.xpose.msra.mxu0 0.0
    %581 = vmatprep.subr.mxu0 0.0
    %582 = vmatpush1.xpose.msra.mxu0 0.0
    %583 = vmatprep.subr.mxu0 0.0
    %584 = vmatpush1.xpose.msra.mxu0 0.0
    %585 = vmatprep.subr.mxu0 0.0
    %586 = vmatpush1.xpose.msra.mxu0 0.0
    %587 = vmatprep.subr.mxu0 0.0
    %588 = vmatpush1.xpose.msra.mxu0 0.0
    %589 = vmatprep.subr.mxu0 0.0
    %590 = vmatpush1.xpose.msra.mxu0 0.0
    %591 = vmatprep.subr.mxu0 0.0
    %592 = vmatpush1.xpose.msra.mxu0 0.0
    %593 = vmatprep.subr.mxu0 0.0
    %594 = vmatpush1.xpose.msra.mxu0 0.0
    %595 = vmatprep.subr.mxu0 0.0
    %596 = vmatpush1.xpose.msra.mxu0 0.0
    %597 = vmatprep.mubr.f32.mxu0 0.0
    %598 = vmatmul.mubr.f32.gmra.mrb[0].mxu0 %v529
    %v599 = vpop.f32.mrb[0].mxu0
    %v600 = vadd.f32 0.0, %v599
    %v601 = vpop.f32.mrb[0].mxu0
    %602 = vdwg.mxu0
    %v604 = vsel %vm200, %v525, 0
    %v606 = vsel %vm200, %v453, 0
    %608 = vmatprep.subr.mxu0 0.0
    %609 = vmatpush1.xpose.msra.mxu0 %v606
    %610 = vmatprep.subr.mxu0 0.0
    %611 = vmatpush1.xpose.msra.mxu0 0.0
    %612 = vmatprep.subr.mxu0 0.0
    %613 = vmatpush1.xpose.msra.mxu0 0.0
    %614 = vmatprep.subr.mxu0 0.0
    %615 = vmatpush1.xpose.msra.mxu0 0.0
    %616 = vmatprep.subr.mxu0 0.0
    %617 = vmatpush1.xpose.msra.mxu0 0.0
    %618 = vmatprep.subr.mxu0 0.0
    %619 = vmatpush1.xpose.msra.mxu0 0.0
    %620 = vmatprep.subr.mxu0 0.0
    %621 = vmatpush1.xpose.msra.mxu0 0.0
    %622 = vmatprep.subr.mxu0 0.0
    %623 = vmatpush1.xpose.msra.mxu0 0.0
    %624 = vmatprep.subr.mxu0 0.0
    %625 = vmatpush1.xpose.msra.mxu0 0.0
    %626 = vmatprep.subr.mxu0 0.0
    %627 = vmatpush1.xpose.msra.mxu0 0.0
    %628 = vmatprep.subr.mxu0 0.0
    %629 = vmatpush1.xpose.msra.mxu0 0.0
    %630 = vmatprep.subr.mxu0 0.0
    %631 = vmatpush1.xpose.msra.mxu0 0.0
    %632 = vmatprep.subr.mxu0 0.0
    %633 = vmatpush1.xpose.msra.mxu0 0.0
    %634 = vmatprep.subr.mxu0 0.0
    %635 = vmatpush1.xpose.msra.mxu0 0.0
    %636 = vmatprep.subr.mxu0 0.0
    %637 = vmatpush1.xpose.msra.mxu0 0.0
    %638 = vmatprep.subr.mxu0 0.0
    %639 = vmatpush1.xpose.msra.mxu0 0.0
    %640 = vmatprep.subr.mxu0 0.0
    %641 = vmatpush1.xpose.msra.mxu0 0.0
    %642 = vmatprep.subr.mxu0 0.0
    %643 = vmatpush1.xpose.msra.mxu0 0.0
    %644 = vmatprep.subr.mxu0 0.0
    %645 = vmatpush1.xpose.msra.mxu0 0.0
    %646 = vmatprep.subr.mxu0 0.0
    %647 = vmatpush1.xpose.msra.mxu0 0.0
    %648 = vmatprep.subr.mxu0 0.0
    %649 = vmatpush1.xpose.msra.mxu0 0.0
    %650 = vmatprep.subr.mxu0 0.0
    %651 = vmatpush1.xpose.msra.mxu0 0.0
    %652 = vmatprep.subr.mxu0 0.0
    %653 = vmatpush1.xpose.msra.mxu0 0.0
    %654 = vmatprep.subr.mxu0 0.0
    %655 = vmatpush1.xpose.msra.mxu0 0.0
    %656 = vmatprep.subr.mxu0 0.0
    %657 = vmatpush1.xpose.msra.mxu0 0.0
    %658 = vmatprep.subr.mxu0 0.0
    %659 = vmatpush1.xpose.msra.mxu0 0.0
    %660 = vmatprep.subr.mxu0 0.0
    %661 = vmatpush1.xpose.msra.mxu0 0.0
    %662 = vmatprep.subr.mxu0 0.0
    %663 = vmatpush1.xpose.msra.mxu0 0.0
    %664 = vmatprep.subr.mxu0 0.0
    %665 = vmatpush1.xpose.msra.mxu0 0.0
    %666 = vmatprep.subr.mxu0 0.0
    %667 = vmatpush1.xpose.msra.mxu0 0.0
    %668 = vmatprep.subr.mxu0 0.0
    %669 = vmatpush1.xpose.msra.mxu0 0.0
    %670 = vmatprep.subr.mxu0 0.0
    %671 = vmatpush1.xpose.msra.mxu0 0.0
    %672 = vmatprep.mubr.f32.mxu0 0.0
    %673 = vmatmul.mubr.f32.gmra.mrb[0].mxu0 %v604
    %v674 = vpop.f32.mrb[0].mxu0
    %v675 = vadd.f32 0.0, %v674
    %v676 = vpop.f32.mrb[0].mxu0
    %677 = vdwg.mxu0
    %v678 = vsel %vm350, %v600, -inf
    %679 = vmax.xlane.f32.xlu0 %v678
    %v680 = vpop.xlane.xlu0 %679
    %v681 = vsel %vm350, %v675, -inf
    %682 = vmax.xlane.f32.xlu0 %v681
    %v683 = vpop.xlane.xlu0 %682
    %v684 = vsub.f32 %v600, %v680
    %v685 = vsub.f32 %v675, %v683
    %v686 = vmul.f32 %v684, 1.442695
    %v687 = vpow.pop %v686
    %v688 = vmul.f32 %v685, 1.442695
    %v689 = vpow.pop %v688
    %v690 = vsel %vm350, %v687, 0.0
    %691 = vadd.xlane.f32.xlu0 %v690
    %v692 = vpop.xlane.xlu0 %691
    %v693 = vsel %vm350, %v689, 0.0
    %694 = vadd.xlane.f32.xlu0 %v693
    %v695 = vpop.xlane.xlu0 %694
    %v696 = vrcp.pop %v692
    %v697 = vrcp.pop %v695
    %v698 = vmul.f32 %v687, %v696
    %v699 = vmul.f32 %v689, %v697
    %700 = vrot.lane.b32.xlu0 %v190, 64
    %v701 = vpop.permute.xlu0 %700
    %v704 = vsel %vm377, %v698, 0
    %706 = vmatprep.subr.mxu0 0.0
    %707 = vmatpush1.msra.mxu0 %v701
    %708 = vmatprep.subr.mxu0 0.0
    %709 = vmatpush1.msra.mxu0 0.0
    %710 = vmatprep.subr.mxu0 0.0
    %711 = vmatpush1.msra.mxu0 0.0
    %712 = vmatprep.subr.mxu0 0.0
    %713 = vmatpush1.msra.mxu0 0.0
    %714 = vmatprep.subr.mxu0 0.0
    %715 = vmatpush1.msra.mxu0 0.0
    %716 = vmatprep.subr.mxu0 0.0
    %717 = vmatpush1.msra.mxu0 0.0
    %718 = vmatprep.subr.mxu0 0.0
    %719 = vmatpush1.msra.mxu0 0.0
    %720 = vmatprep.subr.mxu0 0.0
    %721 = vmatpush1.msra.mxu0 0.0
    %722 = vmatprep.subr.mxu0 0.0
    %723 = vmatpush1.msra.mxu0 0.0
    %724 = vmatprep.subr.mxu0 0.0
    %725 = vmatpush1.msra.mxu0 0.0
    %726 = vmatprep.subr.mxu0 0.0
    %727 = vmatpush1.msra.mxu0 0.0
    %728 = vmatprep.subr.mxu0 0.0
    %729 = vmatpush1.msra.mxu0 0.0
    %730 = vmatprep.subr.mxu0 0.0
    %731 = vmatpush1.msra.mxu0 0.0
    %732 = vmatprep.subr.mxu0 0.0
    %733 = vmatpush1.msra.mxu0 0.0
    %734 = vmatprep.subr.mxu0 0.0
    %735 = vmatpush1.msra.mxu0 0.0
    %736 = vmatprep.subr.mxu0 0.0
    %737 = vmatpush1.msra.mxu0 0.0
    %738 = vmatprep.subr.mxu0 0.0
    %739 = vmatpush1.msra.mxu0 0.0
    %740 = vmatprep.subr.mxu0 0.0
    %741 = vmatpush1.msra.mxu0 0.0
    %742 = vmatprep.subr.mxu0 0.0
    %743 = vmatpush1.msra.mxu0 0.0
    %744 = vmatprep.subr.mxu0 0.0
    %745 = vmatpush1.msra.mxu0 0.0
    %746 = vmatprep.subr.mxu0 0.0
    %747 = vmatpush1.msra.mxu0 0.0
    %748 = vmatprep.subr.mxu0 0.0
    %749 = vmatpush1.msra.mxu0 0.0
    %750 = vmatprep.subr.mxu0 0.0
    %751 = vmatpush1.msra.mxu0 0.0
    %752 = vmatprep.subr.mxu0 0.0
    %753 = vmatpush1.msra.mxu0 0.0
    %754 = vmatprep.subr.mxu0 0.0
    %755 = vmatpush1.msra.mxu0 0.0
    %756 = vmatprep.subr.mxu0 0.0
    %757 = vmatpush1.msra.mxu0 0.0
    %758 = vmatprep.subr.mxu0 0.0
    %759 = vmatpush1.msra.mxu0 0.0
    %760 = vmatprep.subr.mxu0 0.0
    %761 = vmatpush1.msra.mxu0 0.0
    %762 = vmatprep.subr.mxu0 0.0
    %763 = vmatpush1.msra.mxu0 0.0
    %764 = vmatprep.subr.mxu0 0.0
    %765 = vmatpush1.msra.mxu0 0.0
    %766 = vmatprep.subr.mxu0 0.0
    %767 = vmatpush1.msra.mxu0 0.0
    %768 = vmatprep.subr.mxu0 0.0
    %769 = vmatpush1.msra.mxu0 0.0
    %770 = vmatprep.mubr.f32.mxu0 0.0
    %771 = vmatmul.mubr.f32.gmra.mrb[0].mxu0 %v704
    %v772 = vpop.f32.mrb[0].mxu0
    %v773 = vadd.f32 0.0, %v772
    %v774 = vpop.f32.mrb[0].mxu0
    %775 = vdwg.mxu0
    %776 = vrot.lane.b32.xlu0 %v193, 64
    %v777 = vpop.permute.xlu0 %776
    %v780 = vsel %vm377, %v699, 0
    %782 = vmatprep.subr.mxu0 0.0
    %783 = vmatpush1.msra.mxu0 %v777
    %784 = vmatprep.subr.mxu0 0.0
    %785 = vmatpush1.msra.mxu0 0.0
    %786 = vmatprep.subr.mxu0 0.0
    %787 = vmatpush1.msra.mxu0 0.0
    %788 = vmatprep.subr.mxu0 0.0
    %789 = vmatpush1.msra.mxu0 0.0
    %790 = vmatprep.subr.mxu0 0.0
    %791 = vmatpush1.msra.mxu0 0.0
    %792 = vmatprep.subr.mxu0 0.0
    %793 = vmatpush1.msra.mxu0 0.0
    %794 = vmatprep.subr.mxu0 0.0
    %795 = vmatpush1.msra.mxu0 0.0
    %796 = vmatprep.subr.mxu0 0.0
    %797 = vmatpush1.msra.mxu0 0.0
    %798 = vmatprep.subr.mxu0 0.0
    %799 = vmatpush1.msra.mxu0 0.0
    %800 = vmatprep.subr.mxu0 0.0
    %801 = vmatpush1.msra.mxu0 0.0
    %802 = vmatprep.subr.mxu0 0.0
    %803 = vmatpush1.msra.mxu0 0.0
    %804 = vmatprep.subr.mxu0 0.0
    %805 = vmatpush1.msra.mxu0 0.0
    %806 = vmatprep.subr.mxu0 0.0
    %807 = vmatpush1.msra.mxu0 0.0
    %808 = vmatprep.subr.mxu0 0.0
    %809 = vmatpush1.msra.mxu0 0.0
    %810 = vmatprep.subr.mxu0 0.0
    %811 = vmatpush1.msra.mxu0 0.0
    %812 = vmatprep.subr.mxu0 0.0
    %813 = vmatpush1.msra.mxu0 0.0
    %814 = vmatprep.subr.mxu0 0.0
    %815 = vmatpush1.msra.mxu0 0.0
    %816 = vmatprep.subr.mxu0 0.0
    %817 = vmatpush1.msra.mxu0 0.0
    %818 = vmatprep.subr.mxu0 0.0
    %819 = vmatpush1.msra.mxu0 0.0
    %820 = vmatprep.subr.mxu0 0.0
    %821 = vmatpush1.msra.mxu0 0.0
    %822 = vmatprep.subr.mxu0 0.0
    %823 = vmatpush1.msra.mxu0 0.0
    %824 = vmatprep.subr.mxu0 0.0
    %825 = vmatpush1.msra.mxu0 0.0
    %826 = vmatprep.subr.mxu0 0.0
    %827 = vmatpush1.msra.mxu0 0.0
    %828 = vmatprep.subr.mxu0 0.0
    %829 = vmatpush1.msra.mxu0 0.0
    %830 = vmatprep.subr.mxu0 0.0
    %831 = vmatpush1.msra.mxu0 0.0
    %832 = vmatprep.subr.mxu0 0.0
    %833 = vmatpush1.msra.mxu0 0.0
    %834 = vmatprep.subr.mxu0 0.0
    %835 = vmatpush1.msra.mxu0 0.0
    %836 = vmatprep.subr.mxu0 0.0
    %837 = vmatpush1.msra.mxu0 0.0
    %838 = vmatprep.subr.mxu0 0.0
    %839 = vmatpush1.msra.mxu0 0.0
    %840 = vmatprep.subr.mxu0 0.0
    %841 = vmatpush1.msra.mxu0 0.0
    %842 = vmatprep.subr.mxu0 0.0
    %843 = vmatpush1.msra.mxu0 0.0
    %844 = vmatprep.subr.mxu0 0.0
    %845 = vmatpush1.msra.mxu0 0.0
    %846 = vmatprep.mubr.f32.mxu0 0.0
    %847 = vmatmul.mubr.f32.gmra.mrb[0].mxu0 %v780
    %v848 = vpop.f32.mrb[0].mxu0
    %v849 = vadd.f32 0.0, %v848
    %v850 = vpop.f32.mrb[0].mxu0
    %851 = vdwg.mxu0
    %v852 = vadd.f32 %v448, %v773
    %v853 = vadd.f32 %v525, %v849
    %v855 = vsel %vm200, %v852, 0
    %v857 = vsel %vm200, %v701, 0
    %859 = vmatprep.subr.mxu0 0.0
    %860 = vmatpush1.xpose.msra.mxu0 %v857
    %861 = vmatprep.subr.mxu0 0.0
    %862 = vmatpush1.xpose.msra.mxu0 0.0
    %863 = vmatprep.subr.mxu0 0.0
    %864 = vmatpush1.xpose.msra.mxu0 0.0
    %865 = vmatprep.subr.mxu0 0.0
    %866 = vmatpush1.xpose.msra.mxu0 0.0
    %867 = vmatprep.subr.mxu0 0.0
    %868 = vmatpush1.xpose.msra.mxu0 0.0
    %869 = vmatprep.subr.mxu0 0.0
    %870 = vmatpush1.xpose.msra.mxu0 0.0
    %871 = vmatprep.subr.mxu0 0.0
    %872 = vmatpush1.xpose.msra.mxu0 0.0
    %873 = vmatprep.subr.mxu0 0.0
    %874 = vmatpush1.xpose.msra.mxu0 0.0
    %875 = vmatprep.subr.mxu0 0.0
    %876 = vmatpush1.xpose.msra.mxu0 0.0
    %877 = vmatprep.subr.mxu0 0.0
    %878 = vmatpush1.xpose.msra.mxu0 0.0
    %879 = vmatprep.subr.mxu0 0.0
    %880 = vmatpush1.xpose.msra.mxu0 0.0
    %881 = vmatprep.subr.mxu0 0.0
    %882 = vmatpush1.xpose.msra.mxu0 0.0
    %883 = vmatprep.subr.mxu0 0.0
    %884 = vmatpush1.xpose.msra.mxu0 0.0
    %885 = vmatprep.subr.mxu0 0.0
    %886 = vmatpush1.xpose.msra.mxu0 0.0
    %887 = vmatprep.subr.mxu0 0.0
    %888 = vmatpush1.xpose.msra.mxu0 0.0
    %889 = vmatprep.subr.mxu0 0.0
    %890 = vmatpush1.xpose.msra.mxu0 0.0
    %891 = vmatprep.subr.mxu0 0.0
    %892 = vmatpush1.xpose.msra.mxu0 0.0
    %893 = vmatprep.subr.mxu0 0.0
    %894 = vmatpush1.xpose.msra.mxu0 0.0
    %895 = vmatprep.subr.mxu0 0.0
    %896 = vmatpush1.xpose.msra.mxu0 0.0
    %897 = vmatprep.subr.mxu0 0.0
    %898 = vmatpush1.xpose.msra.mxu0 0.0
    %899 = vmatprep.subr.mxu0 0.0
    %900 = vmatpush1.xpose.msra.mxu0 0.0
    %901 = vmatprep.subr.mxu0 0.0
    %902 = vmatpush1.xpose.msra.mxu0 0.0
    %903 = vmatprep.subr.mxu0 0.0
    %904 = vmatpush1.xpose.msra.mxu0 0.0
    %905 = vmatprep.subr.mxu0 0.0
    %906 = vmatpush1.xpose.msra.mxu0 0.0
    %907 = vmatprep.subr.mxu0 0.0
    %908 = vmatpush1.xpose.msra.mxu0 0.0
    %909 = vmatprep.subr.mxu0 0.0
    %910 = vmatpush1.xpose.msra.mxu0 0.0
    %911 = vmatprep.subr.mxu0 0.0
    %912 = vmatpush1.xpose.msra.mxu0 0.0
    %913 = vmatprep.subr.mxu0 0.0
    %914 = vmatpush1.xpose.msra.mxu0 0.0
    %915 = vmatprep.subr.mxu0 0.0
    %916 = vmatpush1.xpose.msra.mxu0 0.0
    %917 = vmatprep.subr.mxu0 0.0
    %918 = vmatpush1.xpose.msra.mxu0 0.0
    %919 = vmatprep.subr.mxu0 0.0
    %920 = vmatpush1.xpose.msra.mxu0 0.0
    %921 = vmatprep.subr.mxu0 0.0
    %922 = vmatpush1.xpose.msra.mxu0 0.0
    %923 = vmatprep.mubr.f32.mxu0 0.0
    %924 = vmatmul.mubr.f32.gmra.mrb[0].mxu0 %v855
    %v925 = vpop.f32.mrb[0].mxu0
    %v926 = vadd.f32 0.0, %v925
    %v927 = vpop.f32.mrb[0].mxu0
    %928 = vdwg.mxu0
    %v930 = vsel %vm200, %v853, 0
    %v932 = vsel %vm200, %v777, 0
    %934 = vmatprep.subr.mxu0 0.0
    %935 = vmatpush1.xpose.msra.mxu0 %v932
    %936 = vmatprep.subr.mxu0 0.0
    %937 = vmatpush1.xpose.msra.mxu0 0.0
    %938 = vmatprep.subr.mxu0 0.0
    %939 = vmatpush1.xpose.msra.mxu0 0.0
    %940 = vmatprep.subr.mxu0 0.0
    %941 = vmatpush1.xpose.msra.mxu0 0.0
    %942 = vmatprep.subr.mxu0 0.0
    %943 = vmatpush1.xpose.msra.mxu0 0.0
    %944 = vmatprep.subr.mxu0 0.0
    %945 = vmatpush1.xpose.msra.mxu0 0.0
    %946 = vmatprep.subr.mxu0 0.0
    %947 = vmatpush1.xpose.msra.mxu0 0.0
    %948 = vmatprep.subr.mxu0 0.0
    %949 = vmatpush1.xpose.msra.mxu0 0.0
    %950 = vmatprep.subr.mxu0 0.0
    %951 = vmatpush1.xpose.msra.mxu0 0.0
    %952 = vmatprep.subr.mxu0 0.0
    %953 = vmatpush1.xpose.msra.mxu0 0.0
    %954 = vmatprep.subr.mxu0 0.0
    %955 = vmatpush1.xpose.msra.mxu0 0.0
    %956 = vmatprep.subr.mxu0 0.0
    %957 = vmatpush1.xpose.msra.mxu0 0.0
    %958 = vmatprep.subr.mxu0 0.0
    %959 = vmatpush1.xpose.msra.mxu0 0.0
    %960 = vmatprep.subr.mxu0 0.0
    %961 = vmatpush1.xpose.msra.mxu0 0.0
    %962 = vmatprep.subr.mxu0 0.0
    %963 = vmatpush1.xpose.msra.mxu0 0.0
    %964 = vmatprep.subr.mxu0 0.0
    %965 = vmatpush1.xpose.msra.mxu0 0.0
    %966 = vmatprep.subr.mxu0 0.0
    %967 = vmatpush1.xpose.msra.mxu0 0.0
    %968 = vmatprep.subr.mxu0 0.0
    %969 = vmatpush1.xpose.msra.mxu0 0.0
    %970 = vmatprep.subr.mxu0 0.0
    %971 = vmatpush1.xpose.msra.mxu0 0.0
    %972 = vmatprep.subr.mxu0 0.0
    %973 = vmatpush1.xpose.msra.mxu0 0.0
    %974 = vmatprep.subr.mxu0 0.0
    %975 = vmatpush1.xpose.msra.mxu0 0.0
    %976 = vmatprep.subr.mxu0 0.0
    %977 = vmatpush1.xpose.msra.mxu0 0.0
    %978 = vmatprep.subr.mxu0 0.0
    %979 = vmatpush1.xpose.msra.mxu0 0.0
    %980 = vmatprep.subr.mxu0 0.0
    %981 = vmatpush1.xpose.msra.mxu0 0.0
    %982 = vmatprep.subr.mxu0 0.0
    %983 = vmatpush1.xpose.msra.mxu0 0.0
    %984 = vmatprep.subr.mxu0 0.0
    %985 = vmatpush1.xpose.msra.mxu0 0.0
    %986 = vmatprep.subr.mxu0 0.0
    %987 = vmatpush1.xpose.msra.mxu0 0.0
    %988 = vmatprep.subr.mxu0 0.0
    %989 = vmatpush1.xpose.msra.mxu0 0.0
    %990 = vmatprep.subr.mxu0 0.0
    %991 = vmatpush1.xpose.msra.mxu0 0.0
    %992 = vmatprep.subr.mxu0 0.0
    %993 = vmatpush1.xpose.msra.mxu0 0.0
    %994 = vmatprep.subr.mxu0 0.0
    %995 = vmatpush1.xpose.msra.mxu0 0.0
    %996 = vmatprep.subr.mxu0 0.0
    %997 = vmatpush1.xpose.msra.mxu0 0.0
    %998 = vmatprep.mubr.f32.mxu0 0.0
    %999 = vmatmul.mubr.f32.gmra.mrb[0].mxu0 %v930
    %v1000 = vpop.f32.mrb[0].mxu0
    %v1001 = vadd.f32 0.0, %v1000
    %v1002 = vpop.f32.mrb[0].mxu0
    %1003 = vdwg.mxu0
    %v1004 = vsel %vm350, %v926, -inf
    %1005 = vmax.xlane.f32.xlu0 %v1004
    %v1006 = vpop.xlane.xlu0 %1005
    %v1007 = vsel %vm350, %v1001, -inf
    %1008 = vmax.xlane.f32.xlu0 %v1007
    %v1009 = vpop.xlane.xlu0 %1008
    %v1010 = vsub.f32 %v926, %v1006
    %v1011 = vsub.f32 %v1001, %v1009
    %v1012 = vmul.f32 %v1010, 1.442695
    %v1013 = vpow.pop %v1012
    %v1014 = vmul.f32 %v1011, 1.442695
    %v1015 = vpow.pop %v1014
    %v1016 = vsel %vm350, %v1013, 0.0
    %1017 = vadd.xlane.f32.xlu0 %v1016
    %v1018 = vpop.xlane.xlu0 %1017
    %v1019 = vsel %vm350, %v1015, 0.0
    %1020 = vadd.xlane.f32.xlu0 %v1019
    %v1021 = vpop.xlane.xlu0 %1020
    %v1022 = vrcp.pop %v1018
    %v1023 = vrcp.pop %v1021
    %v1024 = vmul.f32 %v1013, %v1022
    %v1025 = vmul.f32 %v1015, %v1023
    %1026 = vrot.lane.b32.xlu0 %v190, 32
    %v1027 = vpop.permute.xlu0 %1026
    %v1030 = vsel %vm377, %v1024, 0
    %1032 = vmatprep.subr.mxu0 0.0
    %1033 = vmatpush1.msra.mxu0 %v1027
    %1034 = vmatprep.subr.mxu0 0.0
    %1035 = vmatpush1.msra.mxu0 0.0
    %1036 = vmatprep.subr.mxu0 0.0
    %1037 = vmatpush1.msra.mxu0 0.0
    %1038 = vmatprep.subr.mxu0 0.0
    %1039 = vmatpush1.msra.mxu0 0.0
    %1040 = vmatprep.subr.mxu0 0.0
    %1041 = vmatpush1.msra.mxu0 0.0
    %1042 = vmatprep.subr.mxu0 0.0
    %1043 = vmatpush1.msra.mxu0 0.0
    %1044 = vmatprep.subr.mxu0 0.0
    %1045 = vmatpush1.msra.mxu0 0.0
    %1046 = vmatprep.subr.mxu0 0.0
    %1047 = vmatpush1.msra.mxu0 0.0
    %1048 = vmatprep.subr.mxu0 0.0
    %1049 = vmatpush1.msra.mxu0 0.0
    %1050 = vmatprep.subr.mxu0 0.0
    %1051 = vmatpush1.msra.mxu0 0.0
    %1052 = vmatprep.subr.mxu0 0.0
    %1053 = vmatpush1.msra.mxu0 0.0
    %1054 = vmatprep.subr.mxu0 0.0
    %1055 = vmatpush1.msra.mxu0 0.0
    %1056 = vmatprep.subr.mxu0 0.0
    %1057 = vmatpush1.msra.mxu0 0.0
    %1058 = vmatprep.subr.mxu0 0.0
    %1059 = vmatpush1.msra.mxu0 0.0
    %1060 = vmatprep.subr.mxu0 0.0
    %1061 = vmatpush1.msra.mxu0 0.0
    %1062 = vmatprep.subr.mxu0 0.0
    %1063 = vmatpush1.msra.mxu0 0.0
    %1064 = vmatprep.subr.mxu0 0.0
    %1065 = vmatpush1.msra.mxu0 0.0
    %1066 = vmatprep.subr.mxu0 0.0
    %1067 = vmatpush1.msra.mxu0 0.0
    %1068 = vmatprep.subr.mxu0 0.0
    %1069 = vmatpush1.msra.mxu0 0.0
    %1070 = vmatprep.subr.mxu0 0.0
    %1071 = vmatpush1.msra.mxu0 0.0
    %1072 = vmatprep.subr.mxu0 0.0
    %1073 = vmatpush1.msra.mxu0 0.0
    %1074 = vmatprep.subr.mxu0 0.0
    %1075 = vmatpush1.msra.mxu0 0.0
    %1076 = vmatprep.subr.mxu0 0.0
    %1077 = vmatpush1.msra.mxu0 0.0
    %1078 = vmatprep.subr.mxu0 0.0
    %1079 = vmatpush1.msra.mxu0 0.0
    %1080 = vmatprep.subr.mxu0 0.0
    %1081 = vmatpush1.msra.mxu0 0.0
    %1082 = vmatprep.subr.mxu0 0.0
    %1083 = vmatpush1.msra.mxu0 0.0
    %1084 = vmatprep.subr.mxu0 0.0
    %1085 = vmatpush1.msra.mxu0 0.0
    %1086 = vmatprep.subr.mxu0 0.0
    %1087 = vmatpush1.msra.mxu0 0.0
    %1088 = vmatprep.subr.mxu0 0.0
    %1089 = vmatpush1.msra.mxu0 0.0
    %1090 = vmatprep.subr.mxu0 0.0
    %1091 = vmatpush1.msra.mxu0 0.0
    %1092 = vmatprep.subr.mxu0 0.0
    %1093 = vmatpush1.msra.mxu0 0.0
    %1094 = vmatprep.subr.mxu0 0.0
    %1095 = vmatpush1.msra.mxu0 0.0
    %1096 = vmatprep.mubr.f32.mxu0 0.0
    %1097 = vmatmul.mubr.f32.gmra.mrb[0].mxu0 %v1030
    %v1098 = vpop.f32.mrb[0].mxu0
    %v1099 = vadd.f32 0.0, %v1098
    %v1100 = vpop.f32.mrb[0].mxu0
    %1101 = vdwg.mxu0
    %1102 = vrot.lane.b32.xlu0 %v193, 32
    %v1103 = vpop.permute.xlu0 %1102
    %v1106 = vsel %vm377, %v1025, 0
    %1108 = vmatprep.subr.mxu0 0.0
    %1109 = vmatpush1.msra.mxu0 %v1103
    %1110 = vmatprep.subr.mxu0 0.0
    %1111 = vmatpush1.msra.mxu0 0.0
    %1112 = vmatprep.subr.mxu0 0.0
    %1113 = vmatpush1.msra.mxu0 0.0
    %1114 = vmatprep.subr.mxu0 0.0
    %1115 = vmatpush1.msra.mxu0 0.0
    %1116 = vmatprep.subr.mxu0 0.0
    %1117 = vmatpush1.msra.mxu0 0.0
    %1118 = vmatprep.subr.mxu0 0.0
    %1119 = vmatpush1.msra.mxu0 0.0
    %1120 = vmatprep.subr.mxu0 0.0
    %1121 = vmatpush1.msra.mxu0 0.0
    %1122 = vmatprep.subr.mxu0 0.0
    %1123 = vmatpush1.msra.mxu0 0.0
    %1124 = vmatprep.subr.mxu0 0.0
    %1125 = vmatpush1.msra.mxu0 0.0
    %1126 = vmatprep.subr.mxu0 0.0
    %1127 = vmatpush1.msra.mxu0 0.0
    %1128 = vmatprep.subr.mxu0 0.0
    %1129 = vmatpush1.msra.mxu0 0.0
    %1130 = vmatprep.subr.mxu0 0.0
    %1131 = vmatpush1.msra.mxu0 0.0
    %1132 = vmatprep.subr.mxu0 0.0
    %1133 = vmatpush1.msra.mxu0 0.0
    %1134 = vmatprep.subr.mxu0 0.0
    %1135 = vmatpush1.msra.mxu0 0.0
    %1136 = vmatprep.subr.mxu0 0.0
    %1137 = vmatpush1.msra.mxu0 0.0
    %1138 = vmatprep.subr.mxu0 0.0
    %1139 = vmatpush1.msra.mxu0 0.0
    %1140 = vmatprep.subr.mxu0 0.0
    %1141 = vmatpush1.msra.mxu0 0.0
    %1142 = vmatprep.subr.mxu0 0.0
    %1143 = vmatpush1.msra.mxu0 0.0
    %1144 = vmatprep.subr.mxu0 0.0
    %1145 = vmatpush1.msra.mxu0 0.0
    %1146 = vmatprep.subr.mxu0 0.0
    %1147 = vmatpush1.msra.mxu0 0.0
    %1148 = vmatprep.subr.mxu0 0.0
    %1149 = vmatpush1.msra.mxu0 0.0
    %1150 = vmatprep.subr.mxu0 0.0
    %1151 = vmatpush1.msra.mxu0 0.0
    %1152 = vmatprep.subr.mxu0 0.0
    %1153 = vmatpush1.msra.mxu0 0.0
    %1154 = vmatprep.subr.mxu0 0.0
    %1155 = vmatpush1.msra.mxu0 0.0
    %1156 = vmatprep.subr.mxu0 0.0
    %1157 = vmatpush1.msra.mxu0 0.0
    %1158 = vmatprep.subr.mxu0 0.0
    %1159 = vmatpush1.msra.mxu0 0.0
    %1160 = vmatprep.subr.mxu0 0.0
    %1161 = vmatpush1.msra.mxu0 0.0
    %1162 = vmatprep.subr.mxu0 0.0
    %1163 = vmatpush1.msra.mxu0 0.0
    %1164 = vmatprep.subr.mxu0 0.0
    %1165 = vmatpush1.msra.mxu0 0.0
    %1166 = vmatprep.subr.mxu0 0.0
    %1167 = vmatpush1.msra.mxu0 0.0
    %1168 = vmatprep.subr.mxu0 0.0
    %1169 = vmatpush1.msra.mxu0 0.0
    %1170 = vmatprep.subr.mxu0 0.0
    %1171 = vmatpush1.msra.mxu0 0.0
    %1172 = vmatprep.mubr.f32.mxu0 0.0
    %1173 = vmatmul.mubr.f32.gmra.mrb[0].mxu0 %v1106
    %v1174 = vpop.f32.mrb[0].mxu0
    %v1175 = vadd.f32 0.0, %v1174
    %v1176 = vpop.f32.mrb[0].mxu0
    %1177 = vdwg.mxu0
    %v1178 = vadd.f32 %v852, %v1099
    %v1179 = vadd.f32 %v853, %v1175
    %v1182 = vrot.slane %v1179, 7
    %vm1183 = vcmask 1041409
    %v1184 = vsel %vm1183, %v1182, %v1178
    %v1186 = vsel %vm200, %v1184, 0.0
    %1187 = vst [vmem:[#allocation5] sm:$0x3] %v1186
    // Predicated region
    $region18: #{tpu_custom_call.1} parent=1 // pred_check
      _
    $region19: #{tpu_custom_call.1} parent=1 // pred_check_branch
      %1189 = sbr.rel (0) target = $region21
    $region20: #{tpu_custom_call.1} parent=1 // pred_region
      %s1191 = ssub.s32 32, 32
      %1192 = vsyncadd [#allocation4], %s1191
      %s1194 = sshll.u32 [#allocation5], 4
      %s1195 = int_to_ptr.vmem [resolvable:$true] %s1194
      %1197 = dma.vmem_to_hbm [thread:$0]  %s1195, 32, %s3, [#allocation4]
    $region21: #{tpu_custom_call.1} parent=1 // pred_fallthru
      _
    // Predicated region
    $region22: #{tpu_custom_call.1} parent=1 // pred_check
      _
    $region23: #{tpu_custom_call.1} parent=1 // pred_check_branch
      %1199 = sbr.rel (0) target = $region25
    $region24: #{tpu_custom_call.1} parent=1 // pred_region
      %1200 = dma.done [#allocation4], 32
    $region25: #{tpu_custom_call.1} parent=1 // pred_fallthru
      _
    %1201 = vsyncpa [#allocation3], 1
    %1202 = vsyncpa [#allocation4], 1

</llo_original>
